<compile_context>
chip_gen: v5e
topology: v5e:2x2
jax: 0.10.0
libtpu: 0.0.40
codegen_flags: <defaults>
</compile_context>

<pallas_src>
import functools
import math

import jax
import jax.numpy as jnp
from jax.experimental import pallas as pl
from jax.experimental.pallas import tpu as pltpu


# ----------------------------------------------------------------------------- kernel


def mha_kernel(q_ref, k_ref, v_ref, wq_ref, wk_ref, wv_ref, wo_ref, o_ref,
               *, num_heads, mxu_dtype, approx_reciprocal):
    f32 = jnp.float32
    Bt, Lq, Dq = q_ref.shape
    _, Lk, Dk = k_ref.shape
    Dv = v_ref.shape[2]
    d = wq_ref.shape[2]          # head dim
    H = wo_ref.shape[2]          # Num_Hidden
    n = Bt * num_heads           # fused (batch, head) contraction-batch size

    def proj(x_ref, w_ref, L, D):
        # One head-batched MXU contraction per projection:
        #   (heads, Bt*L, D) x (heads, D, d) -> (heads, Bt*L, d)
        # The input is broadcast along the (cheap, leading) head axis; total FLOPs are identical
        # to a single (Bt*L, D) x (D, H) dot, but the output is already head-split so no lane
        # relayout (reshape/transpose of the lane dim) is ever needed.
        x = x_ref[...].reshape(Bt * L, D).astype(mxu_dtype)          # leading-dim merge only
        xb = jnp.broadcast_to(x[None], (num_heads, Bt * L, D))
        y = jnp.einsum("hmd,hdf->hmf", xb, w_ref[...],
                       preferred_element_type=f32)                   # f32 accumulation
        # (heads, Bt*L, d) -> (heads*Bt, L, d): leading/sublane-only reshape (lane dim unchanged)
        return y.reshape(n, L, d)

    qh = proj(q_ref, wq_ref, Lq, Dq)   # 1/sqrt(head_dim) scale pre-folded into W_Q on the host
    kh = proj(k_ref, wk_ref, Lk, Dk)
    vh = proj(v_ref, wv_ref, Lk, Dv)

    # --- scaled dot-product attention, batched over (batch*heads) in single dot_generals ---
    s = jnp.einsum("nqd,nkd->nqk", qh.astype(mxu_dtype), kh.astype(mxu_dtype),
                   preferred_element_type=f32)                       # (n, Lq, Lk), f32
    m = jnp.max(s, axis=-1, keepdims=True)
    p = jnp.exp(s - m)                                               # EUP, f32
    denom = jnp.sum(p, axis=-1, keepdims=True)
    if approx_reciprocal:
        attn = p * pl.reciprocal(denom, approx=True)                 # EUP reciprocal (frees VALU)
    else:
        attn = p / denom                                             # exact normalization
    ctx = jnp.einsum("nqk,nkd->nqd", attn.astype(mxu_dtype), vh.astype(mxu_dtype),
                     preferred_element_type=f32)                     # (n, Lq, d), f32

    # --- transpose_Output + W_O without any concatenate:
    #       out = sum_h ctx_h @ W_O^T[h*d:(h+1)*d, :]
    #     i.e. one head-batched matmul plus a (free, leading-axis) sum over heads.
    ctx_h = ctx.reshape(num_heads, Bt * Lq, d)                       # leading/sublane-only reshape
    tmp = jnp.einsum("hmd,hdf->hmf", ctx_h.astype(mxu_dtype), wo_ref[...],
                     preferred_element_type=f32)                     # (heads, Bt*Lq, H)
    out = jnp.sum(tmp, axis=0)                                       # (Bt*Lq, H), f32
    o_ref[...] = out.reshape(Bt, Lq, H).astype(o_ref.dtype)


# ----------------------------------------------------------------------------- wrapper


def _tensorcores_per_chip():
    # v7x has 2 TensorCores per chip; v5e/v6e have 1.  Default to 1 (fold the batch) on anything
    # we do not recognize.
    try:
        kind = jax.devices()[0].device_kind.lower()
    except Exception:
        return 1
    return 2 if ("v7" in kind or "7x" in kind) else 1


def prepare_params(params, num_heads, mxu_dtype=jnp.bfloat16):
    """Preprocess the nn.Linear weights ONCE (per the perf review: do not pay transpose /
    scale / cast on every call): transpose to row-major, split per head, fold the
    1/sqrt(head_dim) attention scale into W_Q, and cast to the MXU operand dtype."""
    H, Dq = params["w_q"].shape
    Dk = params["w_k"].shape[1]
    Dv = params["w_v"].shape[1]
    assert H % num_heads == 0
    d = H // num_heads
    scale = math.sqrt(float(H // num_heads))       # torch: sqrt(Num_Hidden // Num_Heads)

    def split_out_cols(w_t, D):                    # (D, H) -> (heads, D, d)
        return w_t.reshape(D, num_heads, d).transpose(1, 0, 2)

    wq = split_out_cols(params["w_q"].T / scale, Dq)         # fold 1/Scale into W_Q
    wk = split_out_cols(params["w_k"].T, Dk)
    wv = split_out_cols(params["w_v"].T, Dv)
    wo = params["w_o"].T.reshape(num_heads, d, H)            # (heads, d, H): per-head input rows
    cast = lambda w: jnp.asarray(w, dtype=mxu_dtype)
    return dict(wq=cast(wq), wk=cast(wk), wv=cast(wv), wo=cast(wo))


def multi_heads_attention(Q, K, V, prepared, num_heads, *, approx_reciprocal=True):
    """Q: (B, Lq, Dq); K: (B, Lk, Dk); V: (B, Lk, Dv).  Returns (B, Lq, Num_Hidden) f32."""
    B, Lq, Dq = Q.shape
    Bk, Lk, Dk = K.shape
    Bv, Lv, Dv = V.shape
    assert B == Bk == Bv and Lk == Lv, "attention requires matching batch and K/V seq length"
    wq, wk, wv, wo = prepared["wq"], prepared["wk"], prepared["wv"], prepared["wo"]
    heads, _, d = wq.shape
    assert heads == num_heads
    H = wo.shape[2]
    mxu_dtype = wq.dtype

    # Generation-aware grid granularity (perf review):
    #   single-TC chips (v5e/v6e): 1 grid step covering the whole batch (avoid per-step overhead,
    #   double the matmul M); dual-TC v7x: one "parallel" step per TensorCore.
    n_cores = _tensorcores_per_chip()
    steps = n_cores if (n_cores > 1 and B % n_cores == 0) else 1
    Bt = B // steps

    kernel = functools.partial(mha_kernel, num_heads=num_heads, mxu_dtype=mxu_dtype,
                               approx_reciprocal=approx_reciprocal)

    # Everything fits VMEM trivially (<100 KB), so whole-slab blocks per grid step.
    # TODO(synk): for large Lq/Lk/H, add an Lk grid axis with online softmax and re-derive tile
    #             sizes per generation (v7x has half the VMEM of v5e/v6e); pad H to 128 lanes.
    return pl.pallas_call(
        kernel,
        out_shape=jax.ShapeDtypeStruct((B, Lq, H), jnp.float32),
        grid=(steps,),
        in_specs=[
            pl.BlockSpec((Bt, Lq, Dq), lambda b: (b, 0, 0)),
            pl.BlockSpec((Bt, Lk, Dk), lambda b: (b, 0, 0)),
            pl.BlockSpec((Bt, Lk, Dv), lambda b: (b, 0, 0)),
            pl.BlockSpec((heads, Dq, d), lambda b: (0, 0, 0)),
            pl.BlockSpec((heads, Dk, d), lambda b: (0, 0, 0)),
            pl.BlockSpec((heads, Dv, d), lambda b: (0, 0, 0)),
            pl.BlockSpec((heads, d, H), lambda b: (0, 0, 0)),
        ],
        out_specs=pl.BlockSpec((Bt, Lq, H), lambda b: (b, 0, 0)),
        compiler_params=pltpu.CompilerParams(dimension_semantics=("parallel",)),
    )(Q, K, V, wq, wk, wv, wo)


def make_multi_heads_attention(params, num_heads, mxu_dtype=jnp.bfloat16,
                               approx_reciprocal=True):
    """Factory: weight prep is cached here (done once), the returned callable is jitted."""
    prepared = prepare_params(params, num_heads, mxu_dtype)
    fwd = functools.partial(multi_heads_attention, prepared=prepared, num_heads=num_heads,
                            approx_reciprocal=approx_reciprocal)
    return jax.jit(lambda Q, K, V: fwd(Q, K, V))


# ----------------------------------------------------------------------------- reference


def ref_forward(Q, K, V, params, num_heads):
    """Plain-JAX replica of the PyTorch forward (dropout in eval mode), full f32 precision."""
    B, Lq, _ = Q.shape
    H = params["w_q"].shape[0]
    d = H // num_heads
    hp = jax.lax.Precision.HIGHEST

    def split(x):
        b, l, _ = x.shape
        return x.reshape(b, l, num_heads, d).transpose(0, 2, 1, 3)   # (B, heads, L, d)

    q = split(jnp.einsum("bld,hd->blh", Q, params["w_q"], precision=hp))
    k = split(jnp.einsum("bld,hd->blh", K, params["w_k"], precision=hp))
    v = split(jnp.einsum("bld,hd->blh", V, params["w_v"], precision=hp))
    s = jnp.einsum("bhqd,bhkd->bhqk", q, k, precision=hp) / jnp.sqrt(jnp.float32(H // num_heads))
    a = jax.nn.softmax(s, axis=-1)
    x = jnp.einsum("bhqk,bhkd->bhqd", a, v, precision=hp)             # (B, heads, Lq, d)
    xc = x.transpose(0, 2, 1, 3).reshape(B, Lq, H)                    # transpose_Output
    return jnp.einsum("blh,oh->blo", xc, params["w_o"], precision=hp)


# ----------------------------------------------------------------------------- test


if __name__ == "__main__":
    # module config: Num_Heads=4, Num_Hidden=32, Q/K/V size=32 (QKV_bias=False), seq=8, batch=2
    B, L, D, H, heads = 2, 8, 32, 32, 4

    key = jax.random.PRNGKey(0)
    kq, kk, kv, k1, k2, k3, k4 = jax.random.split(key, 7)
    Q = jax.random.normal(kq, (B, L, D), dtype=jnp.float32)
    K = jax.random.normal(kk, (B, L, D), dtype=jnp.float32)
    V = jax.random.normal(kv, (B, L, D), dtype=jnp.float32)

    params = dict(
        w_q=0.3 * jax.random.normal(k1, (H, D), dtype=jnp.float32),   # Linear(Q_size, H)
        w_k=0.3 * jax.random.normal(k2, (H, D), dtype=jnp.float32),   # Linear(K_size, H)
        w_v=0.3 * jax.random.normal(k3, (H, D), dtype=jnp.float32),   # Linear(V_size, H)
        w_o=0.3 * jax.random.normal(k4, (H, H), dtype=jnp.float32),   # Linear(H, H)
    )

    ref = ref_forward(Q, K, V, params, heads)

    # 1) Performance configuration: bf16 MXU operands, approx EUP reciprocal.
    #    The comparison bound is the expected bf16-operand rounding envelope (~0.4% relative per
    #    operand through a 3-matmul chain), not a correctness slack.
    mha_fast = make_multi_heads_attention(params, heads, mxu_dtype=jnp.bfloat16,
                                          approx_reciprocal=True)
    out = jax.block_until_ready(mha_fast(Q, K, V))
    assert out.shape == (B, L, H)
    rel = float(jnp.linalg.norm(out - ref) / jnp.linalg.norm(ref))
    max_abs = float(jnp.max(jnp.abs(out - ref)))
    if not (rel < 5e-2 and max_abs < 2.5e-1):
        raise AssertionError(f"bf16 kernel mismatch: rel_fro={rel:.4e} max_abs={max_abs:.4e}")

    # 2) Exact-semantics check: same kernel with f32 MXU operands and exact softmax
    #    normalization must match the PyTorch math tightly.
    mha_exact = make_multi_heads_attention(params, heads, mxu_dtype=jnp.float32,
                                           approx_reciprocal=False)
    out32 = jax.block_until_ready(mha_exact(Q, K, V))
    if not jnp.allclose(out32, ref, atol=2e-3, rtol=2e-3):
        err = float(jnp.max(jnp.abs(out32 - ref)))
        raise AssertionError(f"f32 kernel mismatch: max abs err {err:.4e}")

    print("KERNEL_OK")
</pallas_src>

<mosaic_0001>
module attributes {stable_mosaic.version = 11 : i64} {
  func.func @mha_kernel(%arg0: i32, %arg1: memref<2x8x32xf32, #tpu.memory_space<vmem>>, %arg2: memref<2x8x32xf32, #tpu.memory_space<vmem>>, %arg3: memref<2x8x32xf32, #tpu.memory_space<vmem>>, %arg4: memref<4x32x8xbf16, #tpu.memory_space<vmem>>, %arg5: memref<4x32x8xbf16, #tpu.memory_space<vmem>>, %arg6: memref<4x32x8xbf16, #tpu.memory_space<vmem>>, %arg7: memref<4x8x32xbf16, #tpu.memory_space<vmem>>, %arg8: memref<2x8x32xf32, #tpu.memory_space<vmem>>) attributes {dimension_semantics = [#tpu.dimension_semantics<parallel>], iteration_bounds = array<i64: 1>, scalar_prefetch = 0 : i64, scratch_operands = 0 : i64, tpu.core_type = #tpu.core_type<tc>, window_params = [{transform_indices = @transform_0, window_bounds = array<i64: 2, 8, 32>}, {transform_indices = @transform_1, window_bounds = array<i64: 2, 8, 32>}, {transform_indices = @transform_2, window_bounds = array<i64: 2, 8, 32>}, {pipeline_mode = #tpu.pipeline_mode<synchronous>, transform_indices = @transform_3, window_bounds = array<i64: 4, 32, 8>}, {pipeline_mode = #tpu.pipeline_mode<synchronous>, transform_indices = @transform_4, window_bounds = array<i64: 4, 32, 8>}, {pipeline_mode = #tpu.pipeline_mode<synchronous>, transform_indices = @transform_5, window_bounds = array<i64: 4, 32, 8>}, {pipeline_mode = #tpu.pipeline_mode<synchronous>, transform_indices = @transform_6, window_bounds = array<i64: 4, 8, 32>}, {transform_indices = @transform_7, window_bounds = array<i64: 2, 8, 32>}]} {
    %c0 = arith.constant 0 : index
    %c0_0 = arith.constant 0 : index
    %c0_1 = arith.constant 0 : index
    %0 = vector.load %arg1[%c0, %c0_0, %c0_1] : memref<2x8x32xf32, #tpu.memory_space<vmem>>, vector<2x8x32xf32>
    %1 = vector.shape_cast %0 : vector<2x8x32xf32> to vector<16x32xf32>
    %2 = arith.truncf %1 : vector<16x32xf32> to vector<16x32xbf16>
    %3 = vector.shape_cast %2 : vector<16x32xbf16> to vector<1x16x32xbf16>
    %4 = vector.shape_cast %3 : vector<1x16x32xbf16> to vector<1x16x32xbf16>
    %5 = vector.broadcast %4 : vector<1x16x32xbf16> to vector<4x16x32xbf16>
    %c0_2 = arith.constant 0 : index
    %c0_3 = arith.constant 0 : index
    %c0_4 = arith.constant 0 : index
    %6 = vector.load %arg4[%c0_2, %c0_3, %c0_4] : memref<4x32x8xbf16, #tpu.memory_space<vmem>>, vector<4x32x8xbf16>
    "tpu.trace_start"() <{level = 10 : i32, message = "hmd,hdf->hmf"}> : () -> ()
    %cst = arith.constant dense<0.000000e+00> : vector<4x16x8xf32>
    %7 = tpu.matmul %5, %6, %cst {dimension_numbers = #tpu.dot_dimension_numbers<[2], [1], [1], [2], [0, 0, 0, 1, 1, 2], [0], [0]>} : vector<4x16x32xbf16>, vector<4x32x8xbf16>, vector<4x16x8xf32> -> vector<4x16x8xf32>
    "tpu.trace_stop"() : () -> ()
    %8 = vector.shape_cast %7 : vector<4x16x8xf32> to vector<8x8x8xf32>
    %c0_5 = arith.constant 0 : index
    %c0_6 = arith.constant 0 : index
    %c0_7 = arith.constant 0 : index
    %9 = vector.load %arg2[%c0_5, %c0_6, %c0_7] : memref<2x8x32xf32, #tpu.memory_space<vmem>>, vector<2x8x32xf32>
    %10 = vector.shape_cast %9 : vector<2x8x32xf32> to vector<16x32xf32>
    %11 = arith.truncf %10 : vector<16x32xf32> to vector<16x32xbf16>
    %12 = vector.shape_cast %11 : vector<16x32xbf16> to vector<1x16x32xbf16>
    %13 = vector.shape_cast %12 : vector<1x16x32xbf16> to vector<1x16x32xbf16>
    %14 = vector.broadcast %13 : vector<1x16x32xbf16> to vector<4x16x32xbf16>
    %c0_8 = arith.constant 0 : index
    %c0_9 = arith.constant 0 : index
    %c0_10 = arith.constant 0 : index
    %15 = vector.load %arg5[%c0_8, %c0_9, %c0_10] : memref<4x32x8xbf16, #tpu.memory_space<vmem>>, vector<4x32x8xbf16>
    "tpu.trace_start"() <{level = 10 : i32, message = "hmd,hdf->hmf"}> : () -> ()
    %cst_11 = arith.constant dense<0.000000e+00> : vector<4x16x8xf32>
    %16 = tpu.matmul %14, %15, %cst_11 {dimension_numbers = #tpu.dot_dimension_numbers<[2], [1], [1], [2], [0, 0, 0, 1, 1, 2], [0], [0]>} : vector<4x16x32xbf16>, vector<4x32x8xbf16>, vector<4x16x8xf32> -> vector<4x16x8xf32>
    "tpu.trace_stop"() : () -> ()
    %17 = vector.shape_cast %16 : vector<4x16x8xf32> to vector<8x8x8xf32>
    %c0_12 = arith.constant 0 : index
    %c0_13 = arith.constant 0 : index
    %c0_14 = arith.constant 0 : index
    %18 = vector.load %arg3[%c0_12, %c0_13, %c0_14] : memref<2x8x32xf32, #tpu.memory_space<vmem>>, vector<2x8x32xf32>
    %19 = vector.shape_cast %18 : vector<2x8x32xf32> to vector<16x32xf32>
    %20 = arith.truncf %19 : vector<16x32xf32> to vector<16x32xbf16>
    %21 = vector.shape_cast %20 : vector<16x32xbf16> to vector<1x16x32xbf16>
    %22 = vector.shape_cast %21 : vector<1x16x32xbf16> to vector<1x16x32xbf16>
    %23 = vector.broadcast %22 : vector<1x16x32xbf16> to vector<4x16x32xbf16>
    %c0_15 = arith.constant 0 : index
    %c0_16 = arith.constant 0 : index
    %c0_17 = arith.constant 0 : index
    %24 = vector.load %arg6[%c0_15, %c0_16, %c0_17] : memref<4x32x8xbf16, #tpu.memory_space<vmem>>, vector<4x32x8xbf16>
    "tpu.trace_start"() <{level = 10 : i32, message = "hmd,hdf->hmf"}> : () -> ()
    %cst_18 = arith.constant dense<0.000000e+00> : vector<4x16x8xf32>
    %25 = tpu.matmul %23, %24, %cst_18 {dimension_numbers = #tpu.dot_dimension_numbers<[2], [1], [1], [2], [0, 0, 0, 1, 1, 2], [0], [0]>} : vector<4x16x32xbf16>, vector<4x32x8xbf16>, vector<4x16x8xf32> -> vector<4x16x8xf32>
    "tpu.trace_stop"() : () -> ()
    %26 = vector.shape_cast %25 : vector<4x16x8xf32> to vector<8x8x8xf32>
    %27 = arith.truncf %8 : vector<8x8x8xf32> to vector<8x8x8xbf16>
    %28 = arith.truncf %17 : vector<8x8x8xf32> to vector<8x8x8xbf16>
    "tpu.trace_start"() <{level = 10 : i32, message = "nqd,nkd->nqk"}> : () -> ()
    %cst_19 = arith.constant dense<0.000000e+00> : vector<8x8x8xf32>
    %29 = tpu.matmul %27, %28, %cst_19 {dimension_numbers = #tpu.dot_dimension_numbers<[2], [2], [1], [1], [0, 0, 0, 1, 1, 1], [0], [0]>} : vector<8x8x8xbf16>, vector<8x8x8xbf16>, vector<8x8x8xf32> -> vector<8x8x8xf32>
    "tpu.trace_stop"() : () -> ()
    %cst_20 = arith.constant dense<0xFF800000> : vector<8x8xf32>
    %30 = vector.multi_reduction <maximumf>, %29, %cst_20 [2] : vector<8x8x8xf32> to vector<8x8xf32>
    %31 = vector.shape_cast %30 : vector<8x8xf32> to vector<8x8x1xf32>
    %32 = vector.broadcast %31 : vector<8x8x1xf32> to vector<8x8x8xf32>
    %33 = arith.subf %29, %32 : vector<8x8x8xf32>
    %34 = math.exp %33 : vector<8x8x8xf32>
    %cst_21 = arith.constant dense<0.000000e+00> : vector<8x8xf32>
    %35 = vector.multi_reduction <add>, %34, %cst_21 [2] : vector<8x8x8xf32> to vector<8x8xf32>
    %36 = vector.shape_cast %35 : vector<8x8xf32> to vector<8x8x1xf32>
    %37 = tpu.reciprocal %36 {approx = true} : vector<8x8x1xf32> -> vector<8x8x1xf32>
    %38 = vector.broadcast %37 : vector<8x8x1xf32> to vector<8x8x8xf32>
    %39 = arith.mulf %34, %38 : vector<8x8x8xf32>
    %40 = arith.truncf %39 : vector<8x8x8xf32> to vector<8x8x8xbf16>
    %41 = arith.truncf %26 : vector<8x8x8xf32> to vector<8x8x8xbf16>
    "tpu.trace_start"() <{level = 10 : i32, message = "nqk,nkd->nqd"}> : () -> ()
    %cst_22 = arith.constant dense<0.000000e+00> : vector<8x8x8xf32>
    %42 = tpu.matmul %40, %41, %cst_22 {dimension_numbers = #tpu.dot_dimension_numbers<[2], [1], [1], [2], [0, 0, 0, 1, 1, 2], [0], [0]>} : vector<8x8x8xbf16>, vector<8x8x8xbf16>, vector<8x8x8xf32> -> vector<8x8x8xf32>
    "tpu.trace_stop"() : () -> ()
    %43 = vector.shape_cast %42 : vector<8x8x8xf32> to vector<4x16x8xf32>
    %44 = arith.truncf %43 : vector<4x16x8xf32> to vector<4x16x8xbf16>
    %c0_23 = arith.constant 0 : index
    %c0_24 = arith.constant 0 : index
    %c0_25 = arith.constant 0 : index
    %45 = vector.load %arg7[%c0_23, %c0_24, %c0_25] : memref<4x8x32xbf16, #tpu.memory_space<vmem>>, vector<4x8x32xbf16>
    "tpu.trace_start"() <{level = 10 : i32, message = "hmd,hdf->hmf"}> : () -> ()
    %cst_26 = arith.constant dense<0.000000e+00> : vector<4x16x32xf32>
    %46 = tpu.matmul %44, %45, %cst_26 {dimension_numbers = #tpu.dot_dimension_numbers<[2], [1], [1], [2], [0, 0, 0, 1, 1, 2], [0], [0]>} : vector<4x16x8xbf16>, vector<4x8x32xbf16>, vector<4x16x32xf32> -> vector<4x16x32xf32>
    "tpu.trace_stop"() : () -> ()
    %cst_27 = arith.constant dense<0.000000e+00> : vector<16x32xf32>
    %47 = vector.multi_reduction <add>, %46, %cst_27 [0] : vector<4x16x32xf32> to vector<16x32xf32>
    %48 = vector.shape_cast %47 : vector<16x32xf32> to vector<2x8x32xf32>
    %c0_28 = arith.constant 0 : index
    %c0_29 = arith.constant 0 : index
    %c0_30 = arith.constant 0 : index
    %49 = vector.load %arg8[%c0_28, %c0_29, %c0_30] : memref<2x8x32xf32, #tpu.memory_space<vmem>>, vector<2x8x32xf32>
    tpu.vector_store %arg8[%c0_28, %c0_29, %c0_30], %48 {strides = array<i32>} : memref<2x8x32xf32, #tpu.memory_space<vmem>>, vector<2x8x32xf32>,
    return
  }
  func.func @transform_0(%arg0: i32) -> (i32, i32, i32) {
    %c0_i32 = arith.constant 0 : i32
    %c0_i32_0 = arith.constant 0 : i32
    %c0_i32_1 = arith.constant 0 : i32
    return %arg0, %c0_i32, %c0_i32_0 : i32, i32, i32
  }
  func.func @transform_1(%arg0: i32) -> (i32, i32, i32) {
    %c0_i32 = arith.constant 0 : i32
    %c0_i32_0 = arith.constant 0 : i32
    %c0_i32_1 = arith.constant 0 : i32
    return %arg0, %c0_i32, %c0_i32_0 : i32, i32, i32
  }
  func.func @transform_2(%arg0: i32) -> (i32, i32, i32) {
    %c0_i32 = arith.constant 0 : i32
    %c0_i32_0 = arith.constant 0 : i32
    %c0_i32_1 = arith.constant 0 : i32
    return %arg0, %c0_i32, %c0_i32_0 : i32, i32, i32
  }
  func.func @transform_3(%arg0: i32) -> (i32, i32, i32) {
    %c0_i32 = arith.constant 0 : i32
    %c0_i32_0 = arith.constant 0 : i32
    %c0_i32_1 = arith.constant 0 : i32
    %c0_i32_2 = arith.constant 0 : i32
    return %c0_i32, %c0_i32_0, %c0_i32_1 : i32, i32, i32
  }
  func.func @transform_4(%arg0: i32) -> (i32, i32, i32) {
    %c0_i32 = arith.constant 0 : i32
    %c0_i32_0 = arith.constant 0 : i32
    %c0_i32_1 = arith.constant 0 : i32
    %c0_i32_2 = arith.constant 0 : i32
    return %c0_i32, %c0_i32_0, %c0_i32_1 : i32, i32, i32
  }
  func.func @transform_5(%arg0: i32) -> (i32, i32, i32) {
    %c0_i32 = arith.constant 0 : i32
    %c0_i32_0 = arith.constant 0 : i32
    %c0_i32_1 = arith.constant 0 : i32
    %c0_i32_2 = arith.constant 0 : i32
    return %c0_i32, %c0_i32_0, %c0_i32_1 : i32, i32, i32
  }
  func.func @transform_6(%arg0: i32) -> (i32, i32, i32) {
    %c0_i32 = arith.constant 0 : i32
    %c0_i32_0 = arith.constant 0 : i32
    %c0_i32_1 = arith.constant 0 : i32
    %c0_i32_2 = arith.constant 0 : i32
    return %c0_i32, %c0_i32_0, %c0_i32_1 : i32, i32, i32
  }
  func.func @transform_7(%arg0: i32) -> (i32, i32, i32) {
    %c0_i32 = arith.constant 0 : i32
    %c0_i32_0 = arith.constant 0 : i32
    %c0_i32_1 = arith.constant 0 : i32
    return %arg0, %c0_i32, %c0_i32_0 : i32, i32, i32
  }
}

</mosaic_0001>

<llo_original>
// kernel: _lambda_.1
$region0: #{_lambda_.1}
  #allocation0 [shape = 'u32[]', space=smem, size = 0x4, offset = 0x4, fixed_abs, tag = 'smem constant byte address 0x4 - core index']
  #allocation1 [shape = 'u32[72,128]{1,0:T(1,128)}', space=vmem, size = 0x9000, scoped, tag = 'internal scratch']
  %s0 = inlined_call_operand.hbm [shape: f32[2,8,32], index: 0, kind: input, shape index: {}]
  %s1 = inlined_call_operand.hbm [shape: f32[2,8,32], index: 1, kind: input, shape index: {}]
  %s2 = inlined_call_operand.hbm [shape: f32[2,8,32], index: 2, kind: input, shape index: {}]
  %s3 = inlined_call_operand.hbm [shape: bf16[4,32,8], index: 3, kind: input, shape index: {}]
  %s4 = inlined_call_operand.hbm [shape: bf16[4,32,8], index: 4, kind: input, shape index: {}]
  %s5 = inlined_call_operand.hbm [shape: bf16[4,32,8], index: 5, kind: input, shape index: {}]
  %s6 = inlined_call_operand.hbm [shape: bf16[4,8,32], index: 6, kind: input, shape index: {}]
  %s7 = inlined_call_operand.hbm [shape: f32[2,8,32], index: 7, kind: output, shape index: {}]
  %s8 = sld [smem:[#allocation0]]
  $region66: #{_lambda_.1} parent=0
    _
  %s10 = ssub.s32 1, %s8
  %s11 = scalar_select 0, %s10, %s8
  $region1: #{_lambda_.1} parent=0
    #allocation2 [shape = 'u8[8192]{0}', space=vmem, size = 0x2000, scoped, tag = 'input window, operand 0, single buffered']
    #allocation3 [shape = 's32[1]{0}', space=sflag, size = 0x4, scoped, tag = 'scoped memory for _lambda_.1']
    #allocation4 [shape = 's32[1]{0}', space=sflag, size = 0x4, scoped, tag = 'scoped memory for _lambda_.1']
    #allocation5 [shape = 'u8[8192]{0}', space=vmem, size = 0x2000, scoped, tag = 'input window, operand 1, single buffered']
    #allocation6 [shape = 's32[1]{0}', space=sflag, size = 0x4, scoped, tag = 'scoped memory for _lambda_.1']
    #allocation7 [shape = 'u8[8192]{0}', space=vmem, size = 0x2000, scoped, tag = 'input window, operand 2, single buffered']
    #allocation8 [shape = 'u8[32768]{0}', space=vmem, size = 0x8000, scoped, tag = 'input window, operand 3, single buffered']
    #allocation9 [shape = 's32[1]{0}', space=sflag, size = 0x4, scoped, tag = 'scoped memory for _lambda_.1']
    #allocation10 [shape = 'u8[32768]{0}', space=vmem, size = 0x8000, scoped, tag = 'input window, operand 4, single buffered']
    #allocation11 [shape = 'u8[32768]{0}', space=vmem, size = 0x8000, scoped, tag = 'input window, operand 5, single buffered']
    #allocation12 [shape = 's32[1]{0}', space=sflag, size = 0x4, scoped, tag = 'scoped memory for _lambda_.1']
    #allocation13 [shape = 'u8[8192]{0}', space=vmem, size = 0x2000, scoped, tag = 'input window, operand 6, single buffered']
    #allocation14 [shape = 'u8[8192]{0}', space=vmem, size = 0x2000, scoped, tag = 'output window, operand 0, single buffered']
    %12 = vsyncpa [#allocation3], 0
    %13 = vsyncpa [#allocation6], 0
    %14 = vsyncpa [#allocation9], 0
    %15 = vsyncpa [#allocation12], 0
    %16 = vsyncpa [#allocation4], 0
    // Predicated region
    $region2: #{_lambda_.1} parent=1 // pred_check
      _
    $region3: #{_lambda_.1} parent=1 // pred_check_branch
      %18 = sbr.rel (0) target = $region5
    $region4: #{_lambda_.1} parent=1 // pred_region
      %20 = vsyncadd [#allocation3], 0
      %s21 = sshll.u32 %s0, 4
      %s22 = int_to_ptr.hbm [resolvable:$true] %s21
      %s23 = sshll.u32 [#allocation2], 4
      %s24 = int_to_ptr.vmem [resolvable:$true] %s23
      %29 = dma.hbm_to_vmem [thread:$0]  %s22, 256, %s24, [#allocation3], 128, 128, 8
    $region5: #{_lambda_.1} parent=1 // pred_fallthru
      _
    // Predicated region
    $region6: #{_lambda_.1} parent=1 // pred_check
      _
    $region7: #{_lambda_.1} parent=1 // pred_check_branch
      %31 = sbr.rel (0) target = $region9
    $region8: #{_lambda_.1} parent=1 // pred_region
      %33 = vsyncadd [#allocation6], 0
      %s34 = sshll.u32 %s1, 4
      %s35 = int_to_ptr.hbm [resolvable:$true] %s34
      %s36 = sshll.u32 [#allocation5], 4
      %s37 = int_to_ptr.vmem [resolvable:$true] %s36
      %42 = dma.hbm_to_vmem [thread:$0]  %s35, 256, %s37, [#allocation6], 128, 128, 8
    $region9: #{_lambda_.1} parent=1 // pred_fallthru
      _
    // Predicated region
    $region10: #{_lambda_.1} parent=1 // pred_check
      _
    $region11: #{_lambda_.1} parent=1 // pred_check_branch
      %44 = sbr.rel (0) target = $region13
    $region12: #{_lambda_.1} parent=1 // pred_region
      %46 = vsyncadd [#allocation6], 0
      %s47 = sshll.u32 %s2, 4
      %s48 = int_to_ptr.hbm [resolvable:$true] %s47
      %s49 = sshll.u32 [#allocation7], 4
      %s50 = int_to_ptr.vmem [resolvable:$true] %s49
      %55 = dma.hbm_to_vmem [thread:$0]  %s48, 256, %s50, [#allocation6], 128, 128, 8
    $region13: #{_lambda_.1} parent=1 // pred_fallthru
      _
    // Predicated region
    $region14: #{_lambda_.1} parent=1 // pred_check
      _
    $region15: #{_lambda_.1} parent=1 // pred_check_branch
      %57 = sbr.rel (0) target = $region17
    $region16: #{_lambda_.1} parent=1 // pred_region
      %59 = vsyncadd [#allocation9], 0
      %s60 = sshll.u32 %s3, 4
      %s61 = int_to_ptr.hbm [resolvable:$true] %s60
      %s62 = sshll.u32 [#allocation8], 4
      %s63 = int_to_ptr.vmem [resolvable:$true] %s62
      %68 = dma.hbm_to_vmem [thread:$0]  %s61, 1024, %s63, [#allocation9], 64, 64, 4
    $region17: #{_lambda_.1} parent=1 // pred_fallthru
      _
    // Predicated region
    $region18: #{_lambda_.1} parent=1 // pred_check
      _
    $region19: #{_lambda_.1} parent=1 // pred_check_branch
      %70 = sbr.rel (0) target = $region21
    $region20: #{_lambda_.1} parent=1 // pred_region
      %72 = vsyncadd [#allocation9], 0
      %s73 = sshll.u32 %s4, 4
      %s74 = int_to_ptr.hbm [resolvable:$true] %s73
      %s75 = sshll.u32 [#allocation10], 4
      %s76 = int_to_ptr.vmem [resolvable:$true] %s75
      %81 = dma.hbm_to_vmem [thread:$0]  %s74, 1024, %s76, [#allocation9], 64, 64, 4
    $region21: #{_lambda_.1} parent=1 // pred_fallthru
      _
    // Predicated region
    $region22: #{_lambda_.1} parent=1 // pred_check
      _
    $region23: #{_lambda_.1} parent=1 // pred_check_branch
      %83 = sbr.rel (0) target = $region25
    $region24: #{_lambda_.1} parent=1 // pred_region
      %85 = vsyncadd [#allocation12], 0
      %s86 = sshll.u32 %s5, 4
      %s87 = int_to_ptr.hbm [resolvable:$true] %s86
      %s88 = sshll.u32 [#allocation11], 4
      %s89 = int_to_ptr.vmem [resolvable:$true] %s88
      %94 = dma.hbm_to_vmem [thread:$0]  %s87, 1024, %s89, [#allocation12], 64, 64, 4
    $region25: #{_lambda_.1} parent=1 // pred_fallthru
      _
    // Predicated region
    $region26: #{_lambda_.1} parent=1 // pred_check
      _
    $region27: #{_lambda_.1} parent=1 // pred_check_branch
      %96 = sbr.rel (0) target = $region29
    $region28: #{_lambda_.1} parent=1 // pred_region
      %98 = vsyncadd [#allocation12], 0
      %s99 = sshll.u32 %s6, 4
      %s100 = int_to_ptr.hbm [resolvable:$true] %s99
      %s101 = sshll.u32 [#allocation13], 4
      %s102 = int_to_ptr.vmem [resolvable:$true] %s101
      %107 = dma.hbm_to_vmem [thread:$0]  %s100, 256, %s102, [#allocation12], 64, 64, 4
    $region29: #{_lambda_.1} parent=1 // pred_fallthru
      _
    // Predicated region
    $region30: #{_lambda_.1} parent=1 // pred_check
      _
    $region31: #{_lambda_.1} parent=1 // pred_check_branch
      %109 = sbr.rel (0) target = $region33
    $region32: #{_lambda_.1} parent=1 // pred_region
      %111 = dma.done [#allocation3], 256
    $region33: #{_lambda_.1} parent=1 // pred_fallthru
      _
    // Predicated region
    $region34: #{_lambda_.1} parent=1 // pred_check
      _
    $region35: #{_lambda_.1} parent=1 // pred_check_branch
      %113 = sbr.rel (0) target = $region37
    $region36: #{_lambda_.1} parent=1 // pred_region
      %115 = dma.done [#allocation6], 256
    $region37: #{_lambda_.1} parent=1 // pred_fallthru
      _
    // Predicated region
    $region38: #{_lambda_.1} parent=1 // pred_check
      _
    $region39: #{_lambda_.1} parent=1 // pred_check_branch
      %117 = sbr.rel (0) target = $region41
    $region40: #{_lambda_.1} parent=1 // pred_region
      %119 = dma.done [#allocation6], 256
    $region41: #{_lambda_.1} parent=1 // pred_fallthru
      _
    // Predicated region
    $region42: #{_lambda_.1} parent=1 // pred_check
      _
    $region43: #{_lambda_.1} parent=1 // pred_check_branch
      %121 = sbr.rel (0) target = $region45
    $region44: #{_lambda_.1} parent=1 // pred_region
      %123 = dma.done [#allocation9], 1024
    $region45: #{_lambda_.1} parent=1 // pred_fallthru
      _
    // Predicated region
    $region46: #{_lambda_.1} parent=1 // pred_check
      _
    $region47: #{_lambda_.1} parent=1 // pred_check_branch
      %125 = sbr.rel (0) target = $region49
    $region48: #{_lambda_.1} parent=1 // pred_region
      %127 = dma.done [#allocation9], 1024
    $region49: #{_lambda_.1} parent=1 // pred_fallthru
      _
    // Predicated region
    $region50: #{_lambda_.1} parent=1 // pred_check
      _
    $region51: #{_lambda_.1} parent=1 // pred_check_branch
      %129 = sbr.rel (0) target = $region53
    $region52: #{_lambda_.1} parent=1 // pred_region
      %131 = dma.done [#allocation12], 1024
    $region53: #{_lambda_.1} parent=1 // pred_fallthru
      _
    // Predicated region
    $region54: #{_lambda_.1} parent=1 // pred_check
      _
    $region55: #{_lambda_.1} parent=1 // pred_check_branch
      %133 = sbr.rel (0) target = $region57
    $region56: #{_lambda_.1} parent=1 // pred_region
      %135 = dma.done [#allocation12], 256
    $region57: #{_lambda_.1} parent=1 // pred_fallthru
      _
    %v137 = vld [vmem:[#allocation2] sm:$0xff]
    %v138 = vld [vmem:[#allocation2 + $0x8] sm:$0xff]
    %v139 = vpack.c.bf16 %v137, %v137
    %v140 = vpack.c.bf16 %v138, %v138
    %v141 = vld [vmem:[#allocation8] sm:$0xf]
    %v142 = vld [vmem:[#allocation8 + $0x4] sm:$0xf]
    %v143 = vld [vmem:[#allocation8 + $0x8] sm:$0xf]
    %v144 = vld [vmem:[#allocation8 + $0xc] sm:$0xf]
    %v145 = vld [vmem:[#allocation8 + $0x10] sm:$0xf]
    %v146 = vld [vmem:[#allocation8 + $0x14] sm:$0xf]
    %v147 = vld [vmem:[#allocation8 + $0x18] sm:$0xf]
    %v148 = vld [vmem:[#allocation8 + $0x1c] sm:$0xf]
    %v149 = vld [vmem:[#allocation8 + $0x20] sm:$0xf]
    %v150 = vld [vmem:[#allocation8 + $0x24] sm:$0xf]
    %v151 = vld [vmem:[#allocation8 + $0x28] sm:$0xf]
    %v152 = vld [vmem:[#allocation8 + $0x2c] sm:$0xf]
    %v153 = vld [vmem:[#allocation8 + $0x30] sm:$0xf]
    %v154 = vld [vmem:[#allocation8 + $0x34] sm:$0xf]
    %v155 = vld [vmem:[#allocation8 + $0x38] sm:$0xf]
    %v156 = vld [vmem:[#allocation8 + $0x3c] sm:$0xf]
    %v159 = vunpack.c.l.b16 %v139
    %v160 = vunpack.c.l.b16 %v140
    %v161 = vpack.c.b16 %v160, %v159
    %v166 = vunpack.c.l.b16 %v141
    %v167 = vunpack.c.l.b16 %v142
    %v168 = vunpack.c.l.b16 %v143
    %v169 = vunpack.c.l.b16 %v144
    %v170 = vpack.c.b16 %v167, %v166
    %v171 = vpack.c.b16 %v169, %v168
    %vm174 = vcmask 261120
    %v176 = vsel %vm174, %v161, 0
    %178 = vmatpush.bf16.msra.mxu0 0
    %179 = vmatpush.bf16.msra.mxu0 0
    %180 = vmatpush.bf16.msra.mxu0 0
    %181 = vmatpush.bf16.msra.mxu0 0
    %182 = vmatpush.bf16.msra.mxu0 0
    %183 = vmatpush.bf16.msra.mxu0 0
    %184 = vmatpush.bf16.msra.mxu0 %v171
    %185 = vmatpush.bf16.msra.mxu0 %v170
    %186 = vmatmul.bf16.gmra.mxu0 %v176
    %v187 = vpop.f32.mrf.mxu0
    %v188 = vadd.f32 0.0, %v187
    %v189 = vpop.f32.mrf.mxu0
    %v190 = vadd.f32 0.0, %v189
    %191 = vdwg.mxu0
    %v196 = vunpack.c.l.b16 %v145
    %v197 = vunpack.c.l.b16 %v146
    %v198 = vunpack.c.l.b16 %v147
    %v199 = vunpack.c.l.b16 %v148
    %v200 = vpack.c.b16 %v197, %v196
    %v201 = vpack.c.b16 %v199, %v198
    %204 = vmatpush.bf16.msra.mxu0 0
    %205 = vmatpush.bf16.msra.mxu0 0
    %206 = vmatpush.bf16.msra.mxu0 0
    %207 = vmatpush.bf16.msra.mxu0 0
    %208 = vmatpush.bf16.msra.mxu0 0
    %209 = vmatpush.bf16.msra.mxu0 0
    %210 = vmatpush.bf16.msra.mxu0 %v201
    %211 = vmatpush.bf16.msra.mxu0 %v200
    %212 = vmatmul.bf16.gmra.mxu0 %v176
    %v213 = vpop.f32.mrf.mxu0
    %v214 = vadd.f32 0.0, %v213
    %v215 = vpop.f32.mrf.mxu0
    %v216 = vadd.f32 0.0, %v215
    %217 = vdwg.mxu0
    %v222 = vunpack.c.l.b16 %v149
    %v223 = vunpack.c.l.b16 %v150
    %v224 = vunpack.c.l.b16 %v151
    %v225 = vunpack.c.l.b16 %v152
    %v226 = vpack.c.b16 %v223, %v222
    %v227 = vpack.c.b16 %v225, %v224
    %230 = vmatpush.bf16.msra.mxu0 0
    %231 = vmatpush.bf16.msra.mxu0 0
    %232 = vmatpush.bf16.msra.mxu0 0
    %233 = vmatpush.bf16.msra.mxu0 0
    %234 = vmatpush.bf16.msra.mxu0 0
    %235 = vmatpush.bf16.msra.mxu0 0
    %236 = vmatpush.bf16.msra.mxu0 %v227
    %237 = vmatpush.bf16.msra.mxu0 %v226
    %238 = vmatmul.bf16.gmra.mxu0 %v176
    %v239 = vpop.f32.mrf.mxu0
    %v240 = vadd.f32 0.0, %v239
    %v241 = vpop.f32.mrf.mxu0
    %v242 = vadd.f32 0.0, %v241
    %243 = vdwg.mxu0
    %v248 = vunpack.c.l.b16 %v153
    %v249 = vunpack.c.l.b16 %v154
    %v250 = vunpack.c.l.b16 %v155
    %v251 = vunpack.c.l.b16 %v156
    %v252 = vpack.c.b16 %v249, %v248
    %v253 = vpack.c.b16 %v251, %v250
    %256 = vmatpush.bf16.msra.mxu0 0
    %257 = vmatpush.bf16.msra.mxu0 0
    %258 = vmatpush.bf16.msra.mxu0 0
    %259 = vmatpush.bf16.msra.mxu0 0
    %260 = vmatpush.bf16.msra.mxu0 0
    %261 = vmatpush.bf16.msra.mxu0 0
    %262 = vmatpush.bf16.msra.mxu0 %v253
    %263 = vmatpush.bf16.msra.mxu0 %v252
    %264 = vmatmul.bf16.gmra.mxu0 %v176
    %v265 = vpop.f32.mrf.mxu0
    %v266 = vadd.f32 0.0, %v265
    %v267 = vpop.f32.mrf.mxu0
    %v268 = vadd.f32 0.0, %v267
    %269 = vdwg.mxu0
    %v270 = vld [vmem:[#allocation5] sm:$0xff]
    %v271 = vld [vmem:[#allocation5 + $0x8] sm:$0xff]
    %v272 = vpack.c.bf16 %v270, %v270
    %v273 = vpack.c.bf16 %v271, %v271
    %v274 = vld [vmem:[#allocation10] sm:$0xf]
    %v275 = vld [vmem:[#allocation10 + $0x4] sm:$0xf]
    %v276 = vld [vmem:[#allocation10 + $0x8] sm:$0xf]
    %v277 = vld [vmem:[#allocation10 + $0xc] sm:$0xf]
    %v278 = vld [vmem:[#allocation10 + $0x10] sm:$0xf]
    %v279 = vld [vmem:[#allocation10 + $0x14] sm:$0xf]
    %v280 = vld [vmem:[#allocation10 + $0x18] sm:$0xf]
    %v281 = vld [vmem:[#allocation10 + $0x1c] sm:$0xf]
    %v282 = vld [vmem:[#allocation10 + $0x20] sm:$0xf]
    %v283 = vld [vmem:[#allocation10 + $0x24] sm:$0xf]
    %v284 = vld [vmem:[#allocation10 + $0x28] sm:$0xf]
    %v285 = vld [vmem:[#allocation10 + $0x2c] sm:$0xf]
    %v286 = vld [vmem:[#allocation10 + $0x30] sm:$0xf]
    %v287 = vld [vmem:[#allocation10 + $0x34] sm:$0xf]
    %v288 = vld [vmem:[#allocation10 + $0x38] sm:$0xf]
    %v289 = vld [vmem:[#allocation10 + $0x3c] sm:$0xf]
    %v292 = vunpack.c.l.b16 %v272
    %v293 = vunpack.c.l.b16 %v273
    %v294 = vpack.c.b16 %v293, %v292
    %v299 = vunpack.c.l.b16 %v274
    %v300 = vunpack.c.l.b16 %v275
    %v301 = vunpack.c.l.b16 %v276
    %v302 = vunpack.c.l.b16 %v277
    %v303 = vpack.c.b16 %v300, %v299
    %v304 = vpack.c.b16 %v302, %v301
    %v308 = vsel %vm174, %v294, 0
    %310 = vmatpush.bf16.msra.mxu0 0
    %311 = vmatpush.bf16.msra.mxu0 0
    %312 = vmatpush.bf16.msra.mxu0 0
    %313 = vmatpush.bf16.msra.mxu0 0
    %314 = vmatpush.bf16.msra.mxu0 0
    %315 = vmatpush.bf16.msra.mxu0 0
    %316 = vmatpush.bf16.msra.mxu0 %v304
    %317 = vmatpush.bf16.msra.mxu0 %v303
    %318 = vmatmul.bf16.gmra.mxu0 %v308
    %v319 = vpop.f32.mrf.mxu0
    %v320 = vadd.f32 0.0, %v319
    %v321 = vpop.f32.mrf.mxu0
    %v322 = vadd.f32 0.0, %v321
    %323 = vdwg.mxu0
    %v328 = vunpack.c.l.b16 %v278
    %v329 = vunpack.c.l.b16 %v279
    %v330 = vunpack.c.l.b16 %v280
    %v331 = vunpack.c.l.b16 %v281
    %v332 = vpack.c.b16 %v329, %v328
    %v333 = vpack.c.b16 %v331, %v330
    %336 = vmatpush.bf16.msra.mxu0 0
    %337 = vmatpush.bf16.msra.mxu0 0
    %338 = vmatpush.bf16.msra.mxu0 0
    %339 = vmatpush.bf16.msra.mxu0 0
    %340 = vmatpush.bf16.msra.mxu0 0
    %341 = vmatpush.bf16.msra.mxu0 0
    %342 = vmatpush.bf16.msra.mxu0 %v333
    %343 = vmatpush.bf16.msra.mxu0 %v332
    %344 = vmatmul.bf16.gmra.mxu0 %v308
    %v345 = vpop.f32.mrf.mxu0
    %v346 = vadd.f32 0.0, %v345
    %v347 = vpop.f32.mrf.mxu0
    %v348 = vadd.f32 0.0, %v347
    %349 = vdwg.mxu0
    %v354 = vunpack.c.l.b16 %v282
    %v355 = vunpack.c.l.b16 %v283
    %v356 = vunpack.c.l.b16 %v284
    %v357 = vunpack.c.l.b16 %v285
    %v358 = vpack.c.b16 %v355, %v354
    %v359 = vpack.c.b16 %v357, %v356
    %362 = vmatpush.bf16.msra.mxu0 0
    %363 = vmatpush.bf16.msra.mxu0 0
    %364 = vmatpush.bf16.msra.mxu0 0
    %365 = vmatpush.bf16.msra.mxu0 0
    %366 = vmatpush.bf16.msra.mxu0 0
    %367 = vmatpush.bf16.msra.mxu0 0
    %368 = vmatpush.bf16.msra.mxu0 %v359
    %369 = vmatpush.bf16.msra.mxu0 %v358
    %370 = vmatmul.bf16.gmra.mxu0 %v308
    %v371 = vpop.f32.mrf.mxu0
    %v372 = vadd.f32 0.0, %v371
    %v373 = vpop.f32.mrf.mxu0
    %v374 = vadd.f32 0.0, %v373
    %375 = vdwg.mxu0
    %v380 = vunpack.c.l.b16 %v286
    %v381 = vunpack.c.l.b16 %v287
    %v382 = vunpack.c.l.b16 %v288
    %v383 = vunpack.c.l.b16 %v289
    %v384 = vpack.c.b16 %v381, %v380
    %v385 = vpack.c.b16 %v383, %v382
    %388 = vmatpush.bf16.msra.mxu0 0
    %389 = vmatpush.bf16.msra.mxu0 0
    %390 = vmatpush.bf16.msra.mxu0 0
    %391 = vmatpush.bf16.msra.mxu0 0
    %392 = vmatpush.bf16.msra.mxu0 0
    %393 = vmatpush.bf16.msra.mxu0 0
    %394 = vmatpush.bf16.msra.mxu0 %v385
    %395 = vmatpush.bf16.msra.mxu0 %v384
    %396 = vmatmul.bf16.gmra.mxu0 %v308
    %v397 = vpop.f32.mrf.mxu0
    %v398 = vadd.f32 0.0, %v397
    %v399 = vpop.f32.mrf.mxu0
    %v400 = vadd.f32 0.0, %v399
    %401 = vdwg.mxu0
    %v402 = vld [vmem:[#allocation7] sm:$0xff]
    %v403 = vld [vmem:[#allocation7 + $0x8] sm:$0xff]
    %v404 = vpack.c.bf16 %v402, %v402
    %v405 = vpack.c.bf16 %v403, %v403
    %v406 = vld [vmem:[#allocation11] sm:$0xf]
    %v407 = vld [vmem:[#allocation11 + $0x4] sm:$0xf]
    %v408 = vld [vmem:[#allocation11 + $0x8] sm:$0xf]
    %v409 = vld [vmem:[#allocation11 + $0xc] sm:$0xf]
    %v410 = vld [vmem:[#allocation11 + $0x10] sm:$0xf]
    %v411 = vld [vmem:[#allocation11 + $0x14] sm:$0xf]
    %v412 = vld [vmem:[#allocation11 + $0x18] sm:$0xf]
    %v413 = vld [vmem:[#allocation11 + $0x1c] sm:$0xf]
    %v414 = vld [vmem:[#allocation11 + $0x20] sm:$0xf]
    %v415 = vld [vmem:[#allocation11 + $0x24] sm:$0xf]
    %v416 = vld [vmem:[#allocation11 + $0x28] sm:$0xf]
    %v417 = vld [vmem:[#allocation11 + $0x2c] sm:$0xf]
    %v418 = vld [vmem:[#allocation11 + $0x30] sm:$0xf]
    %v419 = vld [vmem:[#allocation11 + $0x34] sm:$0xf]
    %v420 = vld [vmem:[#allocation11 + $0x38] sm:$0xf]
    %v421 = vld [vmem:[#allocation11 + $0x3c] sm:$0xf]
    %v424 = vunpack.c.l.b16 %v404
    %v425 = vunpack.c.l.b16 %v405
    %v426 = vpack.c.b16 %v425, %v424
    %v431 = vunpack.c.l.b16 %v406
    %v432 = vunpack.c.l.b16 %v407
    %v433 = vunpack.c.l.b16 %v408
    %v434 = vunpack.c.l.b16 %v409
    %v435 = vpack.c.b16 %v432, %v431
    %v436 = vpack.c.b16 %v434, %v433
    %v440 = vsel %vm174, %v426, 0
    %442 = vmatpush.bf16.msra.mxu0 0
    %443 = vmatpush.bf16.msra.mxu0 0
    %444 = vmatpush.bf16.msra.mxu0 0
    %445 = vmatpush.bf16.msra.mxu0 0
    %446 = vmatpush.bf16.msra.mxu0 0
    %447 = vmatpush.bf16.msra.mxu0 0
    %448 = vmatpush.bf16.msra.mxu0 %v436
    %449 = vmatpush.bf16.msra.mxu0 %v435
    %450 = vmatmul.bf16.gmra.mxu0 %v440
    %v451 = vpop.f32.mrf.mxu0
    %v452 = vadd.f32 0.0, %v451
    %v453 = vpop.f32.mrf.mxu0
    %v454 = vadd.f32 0.0, %v453
    %455 = vdwg.mxu0
    %v460 = vunpack.c.l.b16 %v410
    %v461 = vunpack.c.l.b16 %v411
    %v462 = vunpack.c.l.b16 %v412
    %v463 = vunpack.c.l.b16 %v413
    %v464 = vpack.c.b16 %v461, %v460
    %v465 = vpack.c.b16 %v463, %v462
    %468 = vmatpush.bf16.msra.mxu0 0
    %469 = vmatpush.bf16.msra.mxu0 0
    %470 = vmatpush.bf16.msra.mxu0 0
    %471 = vmatpush.bf16.msra.mxu0 0
    %472 = vmatpush.bf16.msra.mxu0 0
    %473 = vmatpush.bf16.msra.mxu0 0
    %474 = vmatpush.bf16.msra.mxu0 %v465
    %475 = vmatpush.bf16.msra.mxu0 %v464
    %476 = vmatmul.bf16.gmra.mxu0 %v440
    %v477 = vpop.f32.mrf.mxu0
    %v478 = vadd.f32 0.0, %v477
    %v479 = vpop.f32.mrf.mxu0
    %v480 = vadd.f32 0.0, %v479
    %481 = vdwg.mxu0
    %v486 = vunpack.c.l.b16 %v414
    %v487 = vunpack.c.l.b16 %v415
    %v488 = vunpack.c.l.b16 %v416
    %v489 = vunpack.c.l.b16 %v417
    %v490 = vpack.c.b16 %v487, %v486
    %v491 = vpack.c.b16 %v489, %v488
    %494 = vmatpush.bf16.msra.mxu0 0
    %495 = vmatpush.bf16.msra.mxu0 0
    %496 = vmatpush.bf16.msra.mxu0 0
    %497 = vmatpush.bf16.msra.mxu0 0
    %498 = vmatpush.bf16.msra.mxu0 0
    %499 = vmatpush.bf16.msra.mxu0 0
    %500 = vmatpush.bf16.msra.mxu0 %v491
    %501 = vmatpush.bf16.msra.mxu0 %v490
    %502 = vmatmul.bf16.gmra.mxu0 %v440
    %v503 = vpop.f32.mrf.mxu0
    %v504 = vadd.f32 0.0, %v503
    %v505 = vpop.f32.mrf.mxu0
    %v506 = vadd.f32 0.0, %v505
    %507 = vdwg.mxu0
    %v512 = vunpack.c.l.b16 %v418
    %v513 = vunpack.c.l.b16 %v419
    %v514 = vunpack.c.l.b16 %v420
    %v515 = vunpack.c.l.b16 %v421
    %v516 = vpack.c.b16 %v513, %v512
    %v517 = vpack.c.b16 %v515, %v514
    %520 = vmatpush.bf16.msra.mxu0 0
    %521 = vmatpush.bf16.msra.mxu0 0
    %522 = vmatpush.bf16.msra.mxu0 0
    %523 = vmatpush.bf16.msra.mxu0 0
    %524 = vmatpush.bf16.msra.mxu0 0
    %525 = vmatpush.bf16.msra.mxu0 0
    %526 = vmatpush.bf16.msra.mxu0 %v517
    %527 = vmatpush.bf16.msra.mxu0 %v516
    %528 = vmatmul.bf16.gmra.mxu0 %v440
    %v529 = vpop.f32.mrf.mxu0
    %v530 = vadd.f32 0.0, %v529
    %v531 = vpop.f32.mrf.mxu0
    %v532 = vadd.f32 0.0, %v531
    %533 = vdwg.mxu0
    %v534 = vpack.c.bf16 %v188, %v188
    %v535 = vpack.c.bf16 %v190, %v190
    %v536 = vpack.c.bf16 %v214, %v214
    %v537 = vpack.c.bf16 %v216, %v216
    %v538 = vpack.c.bf16 %v240, %v240
    %v539 = vpack.c.bf16 %v242, %v242
    %v540 = vpack.c.bf16 %v266, %v266
    %v541 = vpack.c.bf16 %v268, %v268
    %v542 = vpack.c.bf16 %v320, %v320
    %v543 = vpack.c.bf16 %v322, %v322
    %v544 = vpack.c.bf16 %v346, %v346
    %v545 = vpack.c.bf16 %v348, %v348
    %v546 = vpack.c.bf16 %v372, %v372
    %v547 = vpack.c.bf16 %v374, %v374
    %v548 = vpack.c.bf16 %v398, %v398
    %v549 = vpack.c.bf16 %v400, %v400
    %vm550 = vcmask 64512
    %v552 = vsel %vm550, %v534, 0
    %v555 = vsel %vm550, %v542, 0
    %557 = vmatpush.bf16.xpose.msra.mxu0 0
    %558 = vmatpush.bf16.xpose.msra.mxu0 0
    %559 = vmatpush.bf16.xpose.msra.mxu0 0
    %560 = vmatpush.bf16.xpose.msra.mxu0 0
    %561 = vmatpush.bf16.xpose.msra.mxu0 0
    %562 = vmatpush.bf16.xpose.msra.mxu0 0
    %563 = vmatpush.bf16.xpose.msra.mxu0 0
    %564 = vmatpush.bf16.xpose.msra.mxu0 %v555
    %565 = vmatmul.bf16.gmra.mxu0 %v552
    %v566 = vpop.f32.mrf.mxu0
    %v567 = vadd.f32 0.0, %v566
    %v568 = vpop.f32.mrf.mxu0
    %569 = vdwg.mxu0
    %v571 = vsel %vm550, %v535, 0
    %v574 = vsel %vm550, %v543, 0
    %576 = vmatpush.bf16.xpose.msra.mxu0 0
    %577 = vmatpush.bf16.xpose.msra.mxu0 0
    %578 = vmatpush.bf16.xpose.msra.mxu0 0
    %579 = vmatpush.bf16.xpose.msra.mxu0 0
    %580 = vmatpush.bf16.xpose.msra.mxu0 0
    %581 = vmatpush.bf16.xpose.msra.mxu0 0
    %582 = vmatpush.bf16.xpose.msra.mxu0 0
    %583 = vmatpush.bf16.xpose.msra.mxu0 %v574
    %584 = vmatmul.bf16.gmra.mxu0 %v571
    %v585 = vpop.f32.mrf.mxu0
    %v586 = vadd.f32 0.0, %v585
    %v587 = vpop.f32.mrf.mxu0
    %588 = vdwg.mxu0
    %v590 = vsel %vm550, %v536, 0
    %v593 = vsel %vm550, %v544, 0
    %595 = vmatpush.bf16.xpose.msra.mxu0 0
    %596 = vmatpush.bf16.xpose.msra.mxu0 0
    %597 = vmatpush.bf16.xpose.msra.mxu0 0
    %598 = vmatpush.bf16.xpose.msra.mxu0 0
    %599 = vmatpush.bf16.xpose.msra.mxu0 0
    %600 = vmatpush.bf16.xpose.msra.mxu0 0
    %601 = vmatpush.bf16.xpose.msra.mxu0 0
    %602 = vmatpush.bf16.xpose.msra.mxu0 %v593
    %603 = vmatmul.bf16.gmra.mxu0 %v590
    %v604 = vpop.f32.mrf.mxu0
    %v605 = vadd.f32 0.0, %v604
    %v606 = vpop.f32.mrf.mxu0
    %607 = vdwg.mxu0
    %v609 = vsel %vm550, %v537, 0
    %v612 = vsel %vm550, %v545, 0
    %614 = vmatpush.bf16.xpose.msra.mxu0 0
    %615 = vmatpush.bf16.xpose.msra.mxu0 0
    %616 = vmatpush.bf16.xpose.msra.mxu0 0
    %617 = vmatpush.bf16.xpose.msra.mxu0 0
    %618 = vmatpush.bf16.xpose.msra.mxu0 0
    %619 = vmatpush.bf16.xpose.msra.mxu0 0
    %620 = vmatpush.bf16.xpose.msra.mxu0 0
    %621 = vmatpush.bf16.xpose.msra.mxu0 %v612
    %622 = vmatmul.bf16.gmra.mxu0 %v609
    %v623 = vpop.f32.mrf.mxu0
    %v624 = vadd.f32 0.0, %v623
    %v625 = vpop.f32.mrf.mxu0
    %626 = vdwg.mxu0
    %v628 = vsel %vm550, %v538, 0
    %v631 = vsel %vm550, %v546, 0
    %633 = vmatpush.bf16.xpose.msra.mxu0 0
    %634 = vmatpush.bf16.xpose.msra.mxu0 0
    %635 = vmatpush.bf16.xpose.msra.mxu0 0
    %636 = vmatpush.bf16.xpose.msra.mxu0 0
    %637 = vmatpush.bf16.xpose.msra.mxu0 0
    %638 = vmatpush.bf16.xpose.msra.mxu0 0
    %639 = vmatpush.bf16.xpose.msra.mxu0 0
    %640 = vmatpush.bf16.xpose.msra.mxu0 %v631
    %641 = vmatmul.bf16.gmra.mxu0 %v628
    %v642 = vpop.f32.mrf.mxu0
    %v643 = vadd.f32 0.0, %v642
    %v644 = vpop.f32.mrf.mxu0
    %645 = vdwg.mxu0
    %v647 = vsel %vm550, %v539, 0
    %v650 = vsel %vm550, %v547, 0
    %652 = vmatpush.bf16.xpose.msra.mxu0 0
    %653 = vmatpush.bf16.xpose.msra.mxu0 0
    %654 = vmatpush.bf16.xpose.msra.mxu0 0
    %655 = vmatpush.bf16.xpose.msra.mxu0 0
    %656 = vmatpush.bf16.xpose.msra.mxu0 0
    %657 = vmatpush.bf16.xpose.msra.mxu0 0
    %658 = vmatpush.bf16.xpose.msra.mxu0 0
    %659 = vmatpush.bf16.xpose.msra.mxu0 %v650
    %660 = vmatmul.bf16.gmra.mxu0 %v647
    %v661 = vpop.f32.mrf.mxu0
    %v662 = vadd.f32 0.0, %v661
    %v663 = vpop.f32.mrf.mxu0
    %664 = vdwg.mxu0
    %v666 = vsel %vm550, %v540, 0
    %v669 = vsel %vm550, %v548, 0
    %671 = vmatpush.bf16.xpose.msra.mxu0 0
    %672 = vmatpush.bf16.xpose.msra.mxu0 0
    %673 = vmatpush.bf16.xpose.msra.mxu0 0
    %674 = vmatpush.bf16.xpose.msra.mxu0 0
    %675 = vmatpush.bf16.xpose.msra.mxu0 0
    %676 = vmatpush.bf16.xpose.msra.mxu0 0
    %677 = vmatpush.bf16.xpose.msra.mxu0 0
    %678 = vmatpush.bf16.xpose.msra.mxu0 %v669
    %679 = vmatmul.bf16.gmra.mxu0 %v666
    %v680 = vpop.f32.mrf.mxu0
    %v681 = vadd.f32 0.0, %v680
    %v682 = vpop.f32.mrf.mxu0
    %683 = vdwg.mxu0
    %v685 = vsel %vm550, %v541, 0
    %v688 = vsel %vm550, %v549, 0
    %690 = vmatpush.bf16.xpose.msra.mxu0 0
    %691 = vmatpush.bf16.xpose.msra.mxu0 0
    %692 = vmatpush.bf16.xpose.msra.mxu0 0
    %693 = vmatpush.bf16.xpose.msra.mxu0 0
    %694 = vmatpush.bf16.xpose.msra.mxu0 0
    %695 = vmatpush.bf16.xpose.msra.mxu0 0
    %696 = vmatpush.bf16.xpose.msra.mxu0 0
    %697 = vmatpush.bf16.xpose.msra.mxu0 %v688
    %698 = vmatmul.bf16.gmra.mxu0 %v685
    %v699 = vpop.f32.mrf.mxu0
    %v700 = vadd.f32 0.0, %v699
    %v701 = vpop.f32.mrf.mxu0
    %702 = vdwg.mxu0
    %v703 = vsel %vm550, %v567, -inf
    %704 = vmax.xlane.f32.xlu0 %v703
    %v705 = vpop.xlane.xlu0 %704
    %v706 = vsel %vm550, %v586, -inf
    %707 = vmax.xlane.f32.xlu0 %v706
    %v708 = vpop.xlane.xlu0 %707
    %v709 = vsel %vm550, %v605, -inf
    %710 = vmax.xlane.f32.xlu0 %v709
    %v711 = vpop.xlane.xlu0 %710
    %v712 = vsel %vm550, %v624, -inf
    %713 = vmax.xlane.f32.xlu0 %v712
    %v714 = vpop.xlane.xlu0 %713
    %v715 = vsel %vm550, %v643, -inf
    %716 = vmax.xlane.f32.xlu0 %v715
    %v717 = vpop.xlane.xlu0 %716
    %v718 = vsel %vm550, %v662, -inf
    %719 = vmax.xlane.f32.xlu0 %v718
    %v720 = vpop.xlane.xlu0 %719
    %v721 = vsel %vm550, %v681, -inf
    %722 = vmax.xlane.f32.xlu0 %v721
    %v723 = vpop.xlane.xlu0 %722
    %v724 = vsel %vm550, %v700, -inf
    %725 = vmax.xlane.f32.xlu0 %v724
    %v726 = vpop.xlane.xlu0 %725
    %v727 = vsub.f32 %v567, %v705
    %v728 = vsub.f32 %v586, %v708
    %v729 = vsub.f32 %v605, %v711
    %v730 = vsub.f32 %v624, %v714
    %v731 = vsub.f32 %v643, %v717
    %v732 = vsub.f32 %v662, %v720
    %v733 = vsub.f32 %v681, %v723
    %v734 = vsub.f32 %v700, %v726
    %v735 = vmul.f32 %v727, 1.442695
    %v736 = vpow.pop %v735
    %v737 = vmul.f32 %v728, 1.442695
    %v738 = vpow.pop %v737
    %v739 = vmul.f32 %v729, 1.442695
    %v740 = vpow.pop %v739
    %v741 = vmul.f32 %v730, 1.442695
    %v742 = vpow.pop %v741
    %v743 = vmul.f32 %v731, 1.442695
    %v744 = vpow.pop %v743
    %v745 = vmul.f32 %v732, 1.442695
    %v746 = vpow.pop %v745
    %v747 = vmul.f32 %v733, 1.442695
    %v748 = vpow.pop %v747
    %v749 = vmul.f32 %v734, 1.442695
    %v750 = vpow.pop %v749
    %v751 = vsel %vm550, %v736, 0.0
    %752 = vadd.xlane.f32.xlu0 %v751
    %v753 = vpop.xlane.xlu0 %752
    %v754 = vsel %vm550, %v738, 0.0
    %755 = vadd.xlane.f32.xlu0 %v754
    %v756 = vpop.xlane.xlu0 %755
    %v757 = vsel %vm550, %v740, 0.0
    %758 = vadd.xlane.f32.xlu0 %v757
    %v759 = vpop.xlane.xlu0 %758
    %v760 = vsel %vm550, %v742, 0.0
    %761 = vadd.xlane.f32.xlu0 %v760
    %v762 = vpop.xlane.xlu0 %761
    %v763 = vsel %vm550, %v744, 0.0
    %764 = vadd.xlane.f32.xlu0 %v763
    %v765 = vpop.xlane.xlu0 %764
    %v766 = vsel %vm550, %v746, 0.0
    %767 = vadd.xlane.f32.xlu0 %v766
    %v768 = vpop.xlane.xlu0 %767
    %v769 = vsel %vm550, %v748, 0.0
    %770 = vadd.xlane.f32.xlu0 %v769
    %v771 = vpop.xlane.xlu0 %770
    %v772 = vsel %vm550, %v750, 0.0
    %773 = vadd.xlane.f32.xlu0 %v772
    %v774 = vpop.xlane.xlu0 %773
    %v775 = vrcp.pop %v753
    %v776 = vrcp.pop %v756
    %v777 = vrcp.pop %v759
    %v778 = vrcp.pop %v762
    %v779 = vrcp.pop %v765
    %v780 = vrcp.pop %v768
    %v781 = vrcp.pop %v771
    %v782 = vrcp.pop %v774
    %v783 = vmul.f32 %v736, %v775
    %v784 = vmul.f32 %v738, %v776
    %v785 = vmul.f32 %v740, %v777
    %v786 = vmul.f32 %v742, %v778
    %v787 = vmul.f32 %v744, %v779
    %v788 = vmul.f32 %v746, %v780
    %v789 = vmul.f32 %v748, %v781
    %v790 = vmul.f32 %v750, %v782
    %v791 = vpack.c.bf16 %v783, %v783
    %v792 = vpack.c.bf16 %v784, %v784
    %v793 = vpack.c.bf16 %v785, %v785
    %v794 = vpack.c.bf16 %v786, %v786
    %v795 = vpack.c.bf16 %v787, %v787
    %v796 = vpack.c.bf16 %v788, %v788
    %v797 = vpack.c.bf16 %v789, %v789
    %v798 = vpack.c.bf16 %v790, %v790
    %v799 = vpack.c.bf16 %v452, %v452
    %v800 = vpack.c.bf16 %v454, %v454
    %v801 = vpack.c.bf16 %v478, %v478
    %v802 = vpack.c.bf16 %v480, %v480
    %v803 = vpack.c.bf16 %v504, %v504
    %v804 = vpack.c.bf16 %v506, %v506
    %v805 = vpack.c.bf16 %v530, %v530
    %v806 = vpack.c.bf16 %v532, %v532
    %v808 = vsel %vm550, %v791, 0
    %vm810 = vcmask 1043456
    %v812 = vsel %vm810, %v799, 0
    %814 = vmatpush.bf16.msra.mxu0 0
    %815 = vmatpush.bf16.msra.mxu0 0
    %816 = vmatpush.bf16.msra.mxu0 0
    %817 = vmatpush.bf16.msra.mxu0 0
    %818 = vmatpush.bf16.msra.mxu0 0
    %819 = vmatpush.bf16.msra.mxu0 0
    %820 = vmatpush.bf16.msra.mxu0 0
    %821 = vmatpush.bf16.msra.mxu0 %v812
    %822 = vmatmul.bf16.gmra.mxu0 %v808
    %v823 = vpop.f32.mrf.mxu0
    %v824 = vadd.f32 0.0, %v823
    %v825 = vpop.f32.mrf.mxu0
    %826 = vdwg.mxu0
    %v828 = vsel %vm550, %v792, 0
    %v831 = vsel %vm810, %v800, 0
    %833 = vmatpush.bf16.msra.mxu0 0
    %834 = vmatpush.bf16.msra.mxu0 0
    %835 = vmatpush.bf16.msra.mxu0 0
    %836 = vmatpush.bf16.msra.mxu0 0
    %837 = vmatpush.bf16.msra.mxu0 0
    %838 = vmatpush.bf16.msra.mxu0 0
    %839 = vmatpush.bf16.msra.mxu0 0
    %840 = vmatpush.bf16.msra.mxu0 %v831
    %841 = vmatmul.bf16.gmra.mxu0 %v828
    %v842 = vpop.f32.mrf.mxu0
    %v843 = vadd.f32 0.0, %v842
    %v844 = vpop.f32.mrf.mxu0
    %845 = vdwg.mxu0
    %v847 = vsel %vm550, %v793, 0
    %v850 = vsel %vm810, %v801, 0
    %852 = vmatpush.bf16.msra.mxu0 0
    %853 = vmatpush.bf16.msra.mxu0 0
    %854 = vmatpush.bf16.msra.mxu0 0
    %855 = vmatpush.bf16.msra.mxu0 0
    %856 = vmatpush.bf16.msra.mxu0 0
    %857 = vmatpush.bf16.msra.mxu0 0
    %858 = vmatpush.bf16.msra.mxu0 0
    %859 = vmatpush.bf16.msra.mxu0 %v850
    %860 = vmatmul.bf16.gmra.mxu0 %v847
    %v861 = vpop.f32.mrf.mxu0
    %v862 = vadd.f32 0.0, %v861
    %v863 = vpop.f32.mrf.mxu0
    %864 = vdwg.mxu0
    %v866 = vsel %vm550, %v794, 0
    %v869 = vsel %vm810, %v802, 0
    %871 = vmatpush.bf16.msra.mxu0 0
    %872 = vmatpush.bf16.msra.mxu0 0
    %873 = vmatpush.bf16.msra.mxu0 0
    %874 = vmatpush.bf16.msra.mxu0 0
    %875 = vmatpush.bf16.msra.mxu0 0
    %876 = vmatpush.bf16.msra.mxu0 0
    %877 = vmatpush.bf16.msra.mxu0 0
    %878 = vmatpush.bf16.msra.mxu0 %v869
    %879 = vmatmul.bf16.gmra.mxu0 %v866
    %v880 = vpop.f32.mrf.mxu0
    %v881 = vadd.f32 0.0, %v880
    %v882 = vpop.f32.mrf.mxu0
    %883 = vdwg.mxu0
    %v885 = vsel %vm550, %v795, 0
    %v888 = vsel %vm810, %v803, 0
    %890 = vmatpush.bf16.msra.mxu0 0
    %891 = vmatpush.bf16.msra.mxu0 0
    %892 = vmatpush.bf16.msra.mxu0 0
    %893 = vmatpush.bf16.msra.mxu0 0
    %894 = vmatpush.bf16.msra.mxu0 0
    %895 = vmatpush.bf16.msra.mxu0 0
    %896 = vmatpush.bf16.msra.mxu0 0
    %897 = vmatpush.bf16.msra.mxu0 %v888
    %898 = vmatmul.bf16.gmra.mxu0 %v885
    %v899 = vpop.f32.mrf.mxu0
    %v900 = vadd.f32 0.0, %v899
    %v901 = vpop.f32.mrf.mxu0
    %902 = vdwg.mxu0
    %v904 = vsel %vm550, %v796, 0
    %v907 = vsel %vm810, %v804, 0
    %909 = vmatpush.bf16.msra.mxu0 0
    %910 = vmatpush.bf16.msra.mxu0 0
    %911 = vmatpush.bf16.msra.mxu0 0
    %912 = vmatpush.bf16.msra.mxu0 0
    %913 = vmatpush.bf16.msra.mxu0 0
    %914 = vmatpush.bf16.msra.mxu0 0
    %915 = vmatpush.bf16.msra.mxu0 0
    %916 = vmatpush.bf16.msra.mxu0 %v907
    %917 = vmatmul.bf16.gmra.mxu0 %v904
    %v918 = vpop.f32.mrf.mxu0
    %v919 = vadd.f32 0.0, %v918
    %v920 = vpop.f32.mrf.mxu0
    %921 = vdwg.mxu0
    %v923 = vsel %vm550, %v797, 0
    %v926 = vsel %vm810, %v805, 0
    %928 = vmatpush.bf16.msra.mxu0 0
    %929 = vmatpush.bf16.msra.mxu0 0
    %930 = vmatpush.bf16.msra.mxu0 0
    %931 = vmatpush.bf16.msra.mxu0 0
    %932 = vmatpush.bf16.msra.mxu0 0
    %933 = vmatpush.bf16.msra.mxu0 0
    %934 = vmatpush.bf16.msra.mxu0 0
    %935 = vmatpush.bf16.msra.mxu0 %v926
    %936 = vmatmul.bf16.gmra.mxu0 %v923
    %v937 = vpop.f32.mrf.mxu0
    %v938 = vadd.f32 0.0, %v937
    %v939 = vpop.f32.mrf.mxu0
    %940 = vdwg.mxu0
    %v942 = vsel %vm550, %v798, 0
    %v945 = vsel %vm810, %v806, 0
    %947 = vmatpush.bf16.msra.mxu0 0
    %948 = vmatpush.bf16.msra.mxu0 0
    %949 = vmatpush.bf16.msra.mxu0 0
    %950 = vmatpush.bf16.msra.mxu0 0
    %951 = vmatpush.bf16.msra.mxu0 0
    %952 = vmatpush.bf16.msra.mxu0 0
    %953 = vmatpush.bf16.msra.mxu0 0
    %954 = vmatpush.bf16.msra.mxu0 %v945
    %955 = vmatmul.bf16.gmra.mxu0 %v942
    %v956 = vpop.f32.mrf.mxu0
    %v957 = vadd.f32 0.0, %v956
    %v958 = vpop.f32.mrf.mxu0
    %959 = vdwg.mxu0
    %v960 = vpack.c.bf16 %v824, %v824
    %v961 = vpack.c.bf16 %v843, %v843
    %v962 = vpack.c.bf16 %v862, %v862
    %v963 = vpack.c.bf16 %v881, %v881
    %v964 = vpack.c.bf16 %v900, %v900
    %v965 = vpack.c.bf16 %v919, %v919
    %v966 = vpack.c.bf16 %v938, %v938
    %v967 = vpack.c.bf16 %v957, %v957
    %v968 = vld [vmem:[#allocation13] sm:$0xf]
    %v969 = vld [vmem:[#allocation13 + $0x4] sm:$0xf]
    %v970 = vld [vmem:[#allocation13 + $0x8] sm:$0xf]
    %v971 = vld [vmem:[#allocation13 + $0xc] sm:$0xf]
    %v974 = vunpack.c.l.b16 %v960
    %v975 = vunpack.c.l.b16 %v961
    %v976 = vpack.c.b16 %v975, %v974
    %v978 = vsel %vm550, %v976, 0
    %v981 = vsel %vm810, %v968, 0
    %983 = vmatpush.bf16.msra.mxu0 0
    %984 = vmatpush.bf16.msra.mxu0 0
    %985 = vmatpush.bf16.msra.mxu0 0
    %986 = vmatpush.bf16.msra.mxu0 0
    %987 = vmatpush.bf16.msra.mxu0 0
    %988 = vmatpush.bf16.msra.mxu0 0
    %989 = vmatpush.bf16.msra.mxu0 0
    %990 = vmatpush.bf16.msra.mxu0 %v981
    %991 = vmatmul.bf16.gmra.mxu0 %v978
    %v992 = vpop.f32.mrf.mxu0
    %v993 = vadd.f32 0.0, %v992
    %v994 = vpop.f32.mrf.mxu0
    %v995 = vadd.f32 0.0, %v994
    %996 = vdwg.mxu0
    %v999 = vunpack.c.l.b16 %v962
    %v1000 = vunpack.c.l.b16 %v963
    %v1001 = vpack.c.b16 %v1000, %v999
    %v1003 = vsel %vm550, %v1001, 0
    %v1006 = vsel %vm810, %v969, 0
    %1008 = vmatpush.bf16.msra.mxu0 0
    %1009 = vmatpush.bf16.msra.mxu0 0
    %1010 = vmatpush.bf16.msra.mxu0 0
    %1011 = vmatpush.bf16.msra.mxu0 0
    %1012 = vmatpush.bf16.msra.mxu0 0
    %1013 = vmatpush.bf16.msra.mxu0 0
    %1014 = vmatpush.bf16.msra.mxu0 0
    %1015 = vmatpush.bf16.msra.mxu0 %v1006
    %1016 = vmatmul.bf16.gmra.mxu0 %v1003
    %v1017 = vpop.f32.mrf.mxu0
    %v1018 = vadd.f32 0.0, %v1017
    %v1019 = vpop.f32.mrf.mxu0
    %v1020 = vadd.f32 0.0, %v1019
    %1021 = vdwg.mxu0
    %v1024 = vunpack.c.l.b16 %v964
    %v1025 = vunpack.c.l.b16 %v965
    %v1026 = vpack.c.b16 %v1025, %v1024
    %v1028 = vsel %vm550, %v1026, 0
    %v1031 = vsel %vm810, %v970, 0
    %1033 = vmatpush.bf16.msra.mxu0 0
    %1034 = vmatpush.bf16.msra.mxu0 0
    %1035 = vmatpush.bf16.msra.mxu0 0
    %1036 = vmatpush.bf16.msra.mxu0 0
    %1037 = vmatpush.bf16.msra.mxu0 0
    %1038 = vmatpush.bf16.msra.mxu0 0
    %1039 = vmatpush.bf16.msra.mxu0 0
    %1040 = vmatpush.bf16.msra.mxu0 %v1031
    %1041 = vmatmul.bf16.gmra.mxu0 %v1028
    %v1042 = vpop.f32.mrf.mxu0
    %v1043 = vadd.f32 0.0, %v1042
    %v1044 = vpop.f32.mrf.mxu0
    %v1045 = vadd.f32 0.0, %v1044
    %1046 = vdwg.mxu0
    %v1049 = vunpack.c.l.b16 %v966
    %v1050 = vunpack.c.l.b16 %v967
    %v1051 = vpack.c.b16 %v1050, %v1049
    %v1053 = vsel %vm550, %v1051, 0
    %v1056 = vsel %vm810, %v971, 0
    %1058 = vmatpush.bf16.msra.mxu0 0
    %1059 = vmatpush.bf16.msra.mxu0 0
    %1060 = vmatpush.bf16.msra.mxu0 0
    %1061 = vmatpush.bf16.msra.mxu0 0
    %1062 = vmatpush.bf16.msra.mxu0 0
    %1063 = vmatpush.bf16.msra.mxu0 0
    %1064 = vmatpush.bf16.msra.mxu0 0
    %1065 = vmatpush.bf16.msra.mxu0 %v1056
    %1066 = vmatmul.bf16.gmra.mxu0 %v1053
    %v1067 = vpop.f32.mrf.mxu0
    %v1068 = vadd.f32 0.0, %v1067
    %v1069 = vpop.f32.mrf.mxu0
    %v1070 = vadd.f32 0.0, %v1069
    %1071 = vdwg.mxu0
    %v1072 = vsel %vm174, %v993, 0.0
    %v1073 = vsel %vm174, %v1018, 0.0
    %v1074 = vadd.f32 %v1072, %v1073
    %v1075 = vsel %vm174, %v1043, 0.0
    %v1076 = vadd.f32 %v1074, %v1075
    %v1077 = vsel %vm174, %v1068, 0.0
    %v1078 = vadd.f32 %v1076, %v1077
    %v1079 = vsel %vm174, %v995, 0.0
    %v1080 = vsel %vm174, %v1020, 0.0
    %v1081 = vadd.f32 %v1079, %v1080
    %v1082 = vsel %vm174, %v1045, 0.0
    %v1083 = vadd.f32 %v1081, %v1082
    %v1084 = vsel %vm174, %v1070, 0.0
    %v1085 = vadd.f32 %v1083, %v1084
    %1086 = vst.msk [vmem:[#allocation14] sm:$0xff] %vm174, %v1078
    %1087 = vst.msk [vmem:[#allocation14 + $0x8] sm:$0xff] %vm174, %v1085
    // Predicated region
    $region58: #{_lambda_.1} parent=1 // pred_check
      _
    $region59: #{_lambda_.1} parent=1 // pred_check_branch
      %1089 = sbr.rel (0) target = $region61
    $region60: #{_lambda_.1} parent=1 // pred_region
      %1091 = vsyncadd [#allocation4], 0
      %s1092 = sshll.u32 [#allocation14], 4
      %s1093 = int_to_ptr.vmem [resolvable:$true] %s1092
      %s1094 = sshll.u32 %s7, 4
      %s1095 = int_to_ptr.hbm [resolvable:$true] %s1094
      %1100 = dma.vmem_to_hbm [thread:$0]  %s1093, 256, %s1095, [#allocation4], 128, 128, 8
    $region61: #{_lambda_.1} parent=1 // pred_fallthru
      _
    // Predicated region
    $region62: #{_lambda_.1} parent=1 // pred_check
      _
    $region63: #{_lambda_.1} parent=1 // pred_check_branch
      %1102 = sbr.rel (0) target = $region65
    $region64: #{_lambda_.1} parent=1 // pred_region
      %1104 = dma.done [#allocation4], 256
    $region65: #{_lambda_.1} parent=1 // pred_fallthru
      _
    %1105 = vsyncpa [#allocation3], 1
    %1106 = vsyncpa [#allocation6], 1
    %1107 = vsyncpa [#allocation9], 1
    %1108 = vsyncpa [#allocation12], 1
    %1109 = vsyncpa [#allocation4], 1

</llo_original>
